<compile_context>
chip_gen: v6e
topology: v6e:2x2x1
jax: 0.10.0
libtpu: 0.0.40
codegen_flags: <defaults>
</compile_context>

<pallas_src>
import math

import jax
import jax.numpy as jnp
from jax.experimental import pallas as pl
from jax.experimental.pallas import tpu as pltpu


# ----------------------------------------------------------------------------- kernel


def _make_random_layer_kernel(n_inputs: int, needs_cast):
    """Kernel over refs: (x_0..x_{n-1}, W_0..W_{n-1}, out, cast_scratch...).

    x_i   : (B, d_i)    resident across the N grid (constant index map)
    W_i   : (d_i, tn)   column tile of the random matrix (scale pre-folded into W_0)
    out   : (B, tn)     column tile of the result
    cast_j: (B, d_i)    W-dtype copy of x_i (only for inputs whose dtype != W dtype)
    """
    n_cast = sum(needs_cast)

    def kernel(*refs):
        x_refs = refs[:n_inputs]
        w_refs = refs[n_inputs:2 * n_inputs]
        o_ref = refs[2 * n_inputs]
        cast_refs = refs[2 * n_inputs + 1:]

        # Pick the ref each matmul reads its LHS from (cast scratch when dtypes differ).
        src = []
        c = 0
        for i in range(n_inputs):
            if needs_cast[i]:
                src.append(cast_refs[c])
                c += 1
            else:
                src.append(x_refs[i])

        if n_cast:
            # One-time cast of the resident x_i into W-dtype VMEM scratch; subsequent
            # grid steps reuse it (hoists the per-step f32->bf16 VPU work out of the loop
            # and lets the MXU run its bf16 path).
            @pl.when(pl.program_id(0) == 0)
            def _():
                c2 = 0
                for i in range(n_inputs):
                    if needs_cast[i]:
                        cast_refs[c2][...] = x_refs[i][...].astype(cast_refs[c2].dtype)
                        c2 += 1

        acc = jnp.dot(src[0][...], w_refs[0][...],
                      preferred_element_type=jnp.float32)   # scale folded into W_0
        for i in range(1, n_inputs):
            acc = acc * jnp.dot(src[i][...], w_refs[i][...],
                                preferred_element_type=jnp.float32)
        o_ref[...] = acc.astype(o_ref.dtype)

    return kernel


# --------------------------------------------------------------------------- wrappers


def prepare_random_layer_params(random_matrices, output_dim, param_dtype=jnp.bfloat16):
    """One-time (init) preprocessing of the fixed random matrices.

    Folds the 1/output_dim**(1/n) scale into W_0 and casts to `param_dtype`
    (bf16 halves HBM traffic for the W stream, which dominates this kernel —
    prefer it especially on v5e; keep f32 only for parity checks).
    """
    n = len(random_matrices)
    scale = 1.0 / math.pow(float(output_dim), 1.0 / n)
    prepared = []
    for i, w in enumerate(random_matrices):
        w32 = jnp.asarray(w, dtype=jnp.float32)
        if i == 0:
            w32 = w32 * jnp.float32(scale)
        prepared.append(w32.astype(param_dtype))
    return prepared


def _tpu_arch():
    """Return (tensorcores_per_chip, default_vmem_budget_bytes, vmem_limit_cap_bytes)."""
    try:
        kind = jax.devices()[0].device_kind.lower().replace(" ", "")
    except Exception:
        kind = ""
    if ("v7" in kind) or ("tpu7" in kind) or ("7x" in kind):
        # v7x: 2 TensorCores/chip, 64 MiB VMEM per TC -> conservative budget + cap.
        return 2, 40 << 20, 48 << 20
    if ("v4" in kind) or ("v5p" in kind) or ("v3" in kind):
        # Megacore chips: 2 TCs, 128 MiB VMEM.
        return 2, 100 << 20, 110 << 20
    # v5e / v6e (and safe default): 1 TensorCore, 128 MiB VMEM.
    return 1, 100 << 20, 110 << 20


def _vmem_need_bytes(tn, B, d_total, w_itemsize, x_itemsize, out_itemsize):
    """Conservative VMEM footprint for one grid step (default double-buffering)."""
    return (2 * d_total * tn * w_itemsize      # double-buffered W column tiles
            + 2 * B * tn * out_itemsize        # double-buffered output tile
            + 2 * B * d_total * x_itemsize     # resident x inputs (default 2 buffers)
            + B * d_total * w_itemsize)        # in-kernel cast scratch (worst case)


def _pick_tn(output_dim, d_total, B, w_itemsize, x_itemsize, out_itemsize,
             vmem_budget_bytes, num_tc):
    """Pick the lane-dense N tile.

    Single-TC chips: the widest tile that fits (ideally tn = output_dim, grid=(1,)).
    v7x: keep an even split across the two TensorCores only when each step streams
    enough of W (>= ~256 KiB) to amortize the per-step (~0.35 us) overhead.
    """
    def fits(tn):
        return _vmem_need_bytes(tn, B, d_total, w_itemsize, x_itemsize,
                                out_itemsize) <= vmem_budget_bytes

    if output_dim <= 128:
        return output_dim

    divisors = [t for t in (4096, 2048, 1024, 512, 256, 128)
                if t < output_dim and output_dim % t == 0]
    any128 = [t for t in (4096, 2048, 1024, 512, 256, 128) if t < output_dim]

    if num_tc >= 2:
        # v7x-style chips: even step count so both TCs get equal work, and only split
        # when the per-step W tile is big enough to be worth the doubled step overhead.
        for tn in divisors:
            steps = output_dim // tn
            if (steps % 2 == 0 and tn >= 256 and fits(tn)
                    and d_total * tn * w_itemsize >= 256 * 1024):
                return tn

    # Single-TC chips (v5e/v6e) — or v7x when splitting isn't worth it: collapse to a
    # single full-width step whenever it fits (one lane-dense unmasked store).
    if fits(output_dim):
        return output_dim
    for tn in divisors:                       # exact tiling preferred
        if fits(tn):
            return tn
    for tn in any128:                         # non-dividing tiling: last block is partial
        if fits(tn):
            return tn
    return 128


def random_layer_forward(input_list, prepared_matrices, output_dim, *, tn=None,
                         out_dtype=jnp.float32, vmem_budget_bytes=None):
    """Pallas implementation of RandomLayer.forward.

    input_list:          list of arrays, each (B, d_i)
    prepared_matrices:   output of prepare_random_layer_params (scale folded into W_0)
    out_dtype:           f32 (default, matches PyTorch) or bf16 to halve the output write
    """
    n = len(input_list)
    assert n == len(prepared_matrices) and n >= 1
    B = input_list[0].shape[0]
    d_list = [w.shape[0] for w in prepared_matrices]
    for x, d in zip(input_list, d_list):
        assert x.shape == (B, d)
    for w in prepared_matrices:
        assert w.shape[1] == output_dim

    num_tc, default_budget, vmem_cap = _tpu_arch()
    if vmem_budget_bytes is None:
        vmem_budget_bytes = default_budget

    w_itemsize = jnp.dtype(prepared_matrices[0].dtype).itemsize
    x_itemsize = jnp.dtype(input_list[0].dtype).itemsize
    out_itemsize = jnp.dtype(out_dtype).itemsize
    d_total = sum(d_list)

    if tn is None:
        tn = _pick_tn(output_dim, d_total, B, w_itemsize, x_itemsize, out_itemsize,
                      vmem_budget_bytes, num_tc)
    grid = (pl.cdiv(output_dim, tn),)

    # Tight scoped-VMEM limit: actual (double-buffered) footprint + small slack, capped
    # below the per-TC physical VMEM so Mosaic keeps headroom for internal scratch.
    need = _vmem_need_bytes(tn, B, d_total, w_itemsize, x_itemsize, out_itemsize)
    vmem_limit = int(min(need + (4 << 20), vmem_cap))

    w_dtypes = [jnp.dtype(w.dtype) for w in prepared_matrices]
    needs_cast = tuple(jnp.dtype(x.dtype) != wd for x, wd in zip(input_list, w_dtypes))
    cast_scratch = [pltpu.VMEM((B, d), wd)
                    for d, wd, nc in zip(d_list, w_dtypes, needs_cast) if nc]

    # BlockSpecs:
    #  - x_i : full (B, d_i) block, constant index map -> DMA'd once, resident.
    #          (Could be single-buffered via pipeline_mode; left at the default for
    #          lowering portability — the footprint is tiny and accounted 2x above.)
    #  - W_i : (d_i, tn) column tile indexed by the N-grid position.
    #  - out : (B, tn) tile indexed by the N-grid position (lane-dense stores).
    x_specs = [pl.BlockSpec((B, d), lambda j: (0, 0)) for d in d_list]
    w_specs = [pl.BlockSpec((d, tn), lambda j: (0, j)) for d in d_list]
    out_spec = pl.BlockSpec((B, tn), lambda j: (0, j))

    kernel = _make_random_layer_kernel(n, needs_cast)

    return pl.pallas_call(
        kernel,
        out_shape=jax.ShapeDtypeStruct((B, output_dim), out_dtype),
        grid_spec=pltpu.PrefetchScalarGridSpec(
            num_scalar_prefetch=0,
            grid=grid,
            in_specs=x_specs + w_specs,
            out_specs=out_spec,
            scratch_shapes=cast_scratch,
        ),
        compiler_params=pltpu.CompilerParams(
            dimension_semantics=("parallel",),
            vmem_limit_bytes=vmem_limit,
        ),
    )(*input_list, *prepared_matrices)
    # TODO(synk): for realistic CDAN batches, stack callers' rows before calling this —
    # arithmetic intensity is ~B/2 FLOP per byte of W, so batching is the real lever.


def random_layer_reference(input_list, random_matrices, output_dim):
    """Plain-JAX literal mirror of the PyTorch forward (f32, scale applied after)."""
    n = len(input_list)
    return_list = [jnp.dot(input_list[i].astype(jnp.float32),
                           jnp.asarray(random_matrices[i], dtype=jnp.float32))
                   for i in range(n)]
    out = return_list[0] / math.pow(float(output_dim), 1.0 / n)
    for single in return_list[1:]:
        out = out * single
    return out


# ------------------------------------------------------------------------------- main

if __name__ == "__main__":
    # Small shapes consistent with typical RandomLayer usage (e.g. DANN/CDAN: a feature
    # stream and a softmax stream projected to output_dim and multiplied).
    B = 8
    input_dim_list = [32, 16]
    output_dim = 1024  # module default

    key = jax.random.PRNGKey(0)
    k_x0, k_x1, k_w0, k_w1 = jax.random.split(key, 4)

    x0 = jax.random.normal(k_x0, (B, input_dim_list[0]), dtype=jnp.float32)
    x1 = jax.random.normal(k_x1, (B, input_dim_list[1]), dtype=jnp.float32)

    # Deterministic stand-ins for torch.randn(input_dim, output_dim)
    w0 = jax.random.normal(k_w0, (input_dim_list[0], output_dim), dtype=jnp.float32)
    w1 = jax.random.normal(k_w1, (input_dim_list[1], output_dim), dtype=jnp.float32)

    input_list = [x0, x1]
    random_matrices = [w0, w1]

    # ---- exact-precision path: f32 weights (scale folded into W_0 at prepare time) ----
    prep_f32 = prepare_random_layer_params(random_matrices, output_dim,
                                           param_dtype=jnp.float32)
    out_f32 = jax.block_until_ready(
        random_layer_forward(input_list, prep_f32, output_dim))
    assert out_f32.shape == (B, output_dim)

    # Tight kernel-correctness check: reference built from the *same* prepared weights
    # (folding a scalar into W_0 is a mathematically exact reassociation of the forward).
    r_f32 = [jnp.dot(input_list[i], prep_f32[i], preferred_element_type=jnp.float32)
             for i in range(len(input_list))]
    ref_prepared_f32 = r_f32[0]
    for s in r_f32[1:]:
        ref_prepared_f32 = ref_prepared_f32 * s
    assert jnp.allclose(out_f32, ref_prepared_f32, rtol=1e-4, atol=1e-4), \
        "f32 kernel mismatch vs prepared-weights reference"

    # Coarse end-to-end check vs the literal PyTorch-style forward; tolerance is generous
    # only to absorb platform matmul-precision differences unrelated to the kernel.
    ref_literal = random_layer_reference(input_list, random_matrices, output_dim)
    assert jnp.allclose(out_f32, ref_literal, rtol=5e-2, atol=2.5e-1), \
        "f32 kernel mismatch vs literal reference"

    # ---- fast path: bf16 weights in HBM (default), bf16 MXU with f32 accumulation ----
    prep_bf16 = prepare_random_layer_params(random_matrices, output_dim,
                                            param_dtype=jnp.bfloat16)
    out_bf16 = jax.block_until_ready(
        random_layer_forward(input_list, prep_bf16, output_dim))
    assert out_bf16.shape == (B, output_dim)

    xs_bf16 = [x.astype(jnp.bfloat16) for x in input_list]
    r_bf16 = [jnp.dot(xs_bf16[i], prep_bf16[i], preferred_element_type=jnp.float32)
              for i in range(len(input_list))]
    ref_prepared_bf16 = r_bf16[0]
    for s in r_bf16[1:]:
        ref_prepared_bf16 = ref_prepared_bf16 * s
    assert jnp.allclose(out_bf16, ref_prepared_bf16, rtol=1e-2, atol=1e-2), \
        "bf16 kernel mismatch vs prepared-weights reference"

    # ---- bf16-output option (f32 accumulation inside the kernel, bf16 HBM write) ----
    out_bf16o = jax.block_until_ready(
        random_layer_forward(input_list, prep_bf16, output_dim,
                             out_dtype=jnp.bfloat16))
    assert out_bf16o.shape == (B, output_dim) and out_bf16o.dtype == jnp.bfloat16
    assert jnp.allclose(out_bf16o.astype(jnp.float32), ref_prepared_bf16,
                        rtol=5e-2, atol=1e-1), \
        "bf16-output kernel mismatch vs prepared-weights reference"

    print("KERNEL_OK")
</pallas_src>

<mosaic_0001>
module attributes {stable_mosaic.version = 11 : i64} {
  func.func @kernel(%arg0: i32, %arg1: memref<8x32xf32, #tpu.memory_space<vmem>>, %arg2: memref<8x16xf32, #tpu.memory_space<vmem>>, %arg3: memref<32x1024xf32, #tpu.memory_space<vmem>>, %arg4: memref<16x1024xf32, #tpu.memory_space<vmem>>, %arg5: memref<8x1024xf32, #tpu.memory_space<vmem>>) attributes {dimension_semantics = [#tpu.dimension_semantics<parallel>], iteration_bounds = array<i64: 1>, scalar_prefetch = 0 : i64, scratch_operands = 0 : i64, tpu.core_type = #tpu.core_type<tc>, window_params = [{pipeline_mode = #tpu.pipeline_mode<synchronous>, transform_indices = @transform_0, window_bounds = array<i64: 8, 32>}, {pipeline_mode = #tpu.pipeline_mode<synchronous>, transform_indices = @transform_1, window_bounds = array<i64: 8, 16>}, {transform_indices = @transform_2, window_bounds = array<i64: 32, 1024>}, {transform_indices = @transform_3, window_bounds = array<i64: 16, 1024>}, {transform_indices = @transform_4, window_bounds = array<i64: 8, 1024>}]} {
    %c0 = arith.constant 0 : index
    %c0_0 = arith.constant 0 : index
    %0 = vector.load %arg1[%c0, %c0_0] : memref<8x32xf32, #tpu.memory_space<vmem>>, vector<8x32xf32>
    %c0_1 = arith.constant 0 : index
    %c0_2 = arith.constant 0 : index
    %1 = vector.load %arg3[%c0_1, %c0_2] : memref<32x1024xf32, #tpu.memory_space<vmem>>, vector<32x1024xf32>
    %cst = arith.constant dense<0.000000e+00> : vector<8x1024xf32>
    %2 = tpu.matmul %0, %1, %cst {dimension_numbers = #tpu.dot_dimension_numbers<[1], [0], [0], [1], [0, 0, 1, 1], [], []>} : vector<8x32xf32>, vector<32x1024xf32>, vector<8x1024xf32> -> vector<8x1024xf32>
    %c0_3 = arith.constant 0 : index
    %c0_4 = arith.constant 0 : index
    %3 = vector.load %arg2[%c0_3, %c0_4] : memref<8x16xf32, #tpu.memory_space<vmem>>, vector<8x16xf32>
    %c0_5 = arith.constant 0 : index
    %c0_6 = arith.constant 0 : index
    %4 = vector.load %arg4[%c0_5, %c0_6] : memref<16x1024xf32, #tpu.memory_space<vmem>>, vector<16x1024xf32>
    %cst_7 = arith.constant dense<0.000000e+00> : vector<8x1024xf32>
    %5 = tpu.matmul %3, %4, %cst_7 {dimension_numbers = #tpu.dot_dimension_numbers<[1], [0], [0], [1], [0, 0, 1, 1], [], []>} : vector<8x16xf32>, vector<16x1024xf32>, vector<8x1024xf32> -> vector<8x1024xf32>
    %6 = arith.mulf %2, %5 : vector<8x1024xf32>
    %c0_8 = arith.constant 0 : index
    %c0_9 = arith.constant 0 : index
    %7 = vector.load %arg5[%c0_8, %c0_9] : memref<8x1024xf32, #tpu.memory_space<vmem>>, vector<8x1024xf32>
    tpu.vector_store %arg5[%c0_8, %c0_9], %6 {strides = array<i32>} : memref<8x1024xf32, #tpu.memory_space<vmem>>, vector<8x1024xf32>,
    return
  }
  func.func @transform_0(%arg0: i32) -> (i32, i32) {
    %c0_i32 = arith.constant 0 : i32
    %c0_i32_0 = arith.constant 0 : i32
    %c0_i32_1 = arith.constant 0 : i32
    return %c0_i32, %c0_i32_0 : i32, i32
  }
  func.func @transform_1(%arg0: i32) -> (i32, i32) {
    %c0_i32 = arith.constant 0 : i32
    %c0_i32_0 = arith.constant 0 : i32
    %c0_i32_1 = arith.constant 0 : i32
    return %c0_i32, %c0_i32_0 : i32, i32
  }
  func.func @transform_2(%arg0: i32) -> (i32, i32) {
    %c0_i32 = arith.constant 0 : i32
    %c0_i32_0 = arith.constant 0 : i32
    return %c0_i32, %arg0 : i32, i32
  }
  func.func @transform_3(%arg0: i32) -> (i32, i32) {
    %c0_i32 = arith.constant 0 : i32
    %c0_i32_0 = arith.constant 0 : i32
    return %c0_i32, %arg0 : i32, i32
  }
  func.func @transform_4(%arg0: i32) -> (i32, i32) {
    %c0_i32 = arith.constant 0 : i32
    %c0_i32_0 = arith.constant 0 : i32
    return %c0_i32, %arg0 : i32, i32
  }
}

</mosaic_0001>

<llo_original>
// kernel: tpu_custom_call.1
$region0: #{tpu_custom_call.1}
  #allocation0 [shape = 'u32[]', space=smem, size = 0x4, offset = 0x4, fixed_abs, tag = 'smem constant byte address 0x4 - core index']
  #allocation1 [shape = 'u32[144,128]{1,0:T(1,128)}', space=vmem, size = 0x12000, scoped, tag = 'internal scratch']
  %s0 = inlined_call_operand.hbm [shape: f32[8,32], index: 0, kind: input, shape index: {}]
  %s1 = inlined_call_operand.hbm [shape: f32[8,16], index: 1, kind: input, shape index: {}]
  %s2 = inlined_call_operand.hbm [shape: f32[32,1024], index: 2, kind: input, shape index: {}]
  %s3 = inlined_call_operand.hbm [shape: f32[16,1024], index: 3, kind: input, shape index: {}]
  %s4 = inlined_call_operand.hbm [shape: f32[8,1024], index: 4, kind: output, shape index: {}]
  %s5 = sld [smem:[#allocation0]]
  $region42: #{tpu_custom_call.1} parent=0
    _
  %s7 = ssub.s32 1, %s5
  %s8 = scalar_select 0, %s7, %s5
  $region1: #{tpu_custom_call.1} parent=0
    #allocation2 [shape = 'u8[4096]{0}', space=vmem, size = 0x1000, scoped, tag = 'input window, operand 0, single buffered']
    #allocation3 [shape = 's32[1]{0}', space=sflag, size = 0x4, scoped, tag = 'scoped memory for tpu_custom_call.1']
    #allocation4 [shape = 's32[1]{0}', space=sflag, size = 0x4, scoped, tag = 'scoped memory for tpu_custom_call.1']
    #allocation5 [shape = 'u8[4096]{0}', space=vmem, size = 0x1000, scoped, tag = 'input window, operand 1, single buffered']
    #allocation6 [shape = 's32[1]{0}', space=sflag, size = 0x4, scoped, tag = 'scoped memory for tpu_custom_call.1']
    #allocation7 [shape = 'u8[131072]{0}', space=vmem, size = 0x20000, scoped, tag = 'input window, operand 2, single buffered']
    #allocation8 [shape = 'u8[65536]{0}', space=vmem, size = 0x10000, scoped, tag = 'input window, operand 3, single buffered']
    #allocation9 [shape = 's32[1]{0}', space=sflag, size = 0x4, scoped, tag = 'scoped memory for tpu_custom_call.1']
    #allocation10 [shape = 'u8[32768]{0}', space=vmem, size = 0x8000, scoped, tag = 'output window, operand 0, single buffered']
    %9 = vsyncpa [#allocation3], 0
    %10 = vsyncpa [#allocation6], 0
    %11 = vsyncpa [#allocation9], 0
    %12 = vsyncpa [#allocation4], 0
    // Predicated region
    $region2: #{tpu_custom_call.1} parent=1 // pred_check
      _
    $region3: #{tpu_custom_call.1} parent=1 // pred_check_branch
      %14 = sbr.rel (0) target = $region5
    $region4: #{tpu_custom_call.1} parent=1 // pred_region
      %s16 = ssub.s32 128, 128
      %17 = vsyncadd [#allocation3], %s16
      %s19 = sshll.u32 [#allocation2], 4
      %s20 = int_to_ptr.vmem [resolvable:$true] %s19
      %22 = dma.hbm_to_vmem [thread:$0]  %s0, 128, %s20, [#allocation3]
    $region5: #{tpu_custom_call.1} parent=1 // pred_fallthru
      _
    // Predicated region
    $region6: #{tpu_custom_call.1} parent=1 // pred_check
      _
    $region7: #{tpu_custom_call.1} parent=1 // pred_check_branch
      %24 = sbr.rel (0) target = $region9
    $region8: #{tpu_custom_call.1} parent=1 // pred_region
      %s26 = ssub.s32 128, 128
      %27 = vsyncadd [#allocation6], %s26
      %s29 = sshll.u32 [#allocation5], 4
      %s30 = int_to_ptr.vmem [resolvable:$true] %s29
      %32 = dma.hbm_to_vmem [thread:$0]  %s1, 128, %s30, [#allocation6]
    $region9: #{tpu_custom_call.1} parent=1 // pred_fallthru
      _
    // Predicated region
    $region10: #{tpu_custom_call.1} parent=1 // pred_check
      _
    $region11: #{tpu_custom_call.1} parent=1 // pred_check_branch
      %34 = sbr.rel (0) target = $region13
    $region12: #{tpu_custom_call.1} parent=1 // pred_region
      %s36 = ssub.s32 4096, 4096
      %37 = vsyncadd [#allocation6], %s36
      %s38 = sshll.u32 [#allocation7], 4
      %s39 = int_to_ptr.vmem [resolvable:$true] %s38
      %44 = dma.hbm_to_vmem [thread:$0]  %s2, 4096, %s39, [#allocation6], 1024, 1024, 64
    $region13: #{tpu_custom_call.1} parent=1 // pred_fallthru
      _
    // Predicated region
    $region14: #{tpu_custom_call.1} parent=1 // pred_check
      _
    $region15: #{tpu_custom_call.1} parent=1 // pred_check_branch
      %46 = sbr.rel (0) target = $region17
    $region16: #{tpu_custom_call.1} parent=1 // pred_region
      %s48 = ssub.s32 2048, 2048
      %49 = vsyncadd [#allocation9], %s48
      %s50 = sshll.u32 [#allocation8], 4
      %s51 = int_to_ptr.vmem [resolvable:$true] %s50
      %56 = dma.hbm_to_vmem [thread:$0]  %s3, 2048, %s51, [#allocation9], 1024, 1024, 64
    $region17: #{tpu_custom_call.1} parent=1 // pred_fallthru
      _
    // Predicated region
    $region18: #{tpu_custom_call.1} parent=1 // pred_check
      _
    $region19: #{tpu_custom_call.1} parent=1 // pred_check_branch
      %58 = sbr.rel (0) target = $region21
    $region20: #{tpu_custom_call.1} parent=1 // pred_region
      %59 = dma.done [#allocation3], 128
    $region21: #{tpu_custom_call.1} parent=1 // pred_fallthru
      _
    // Predicated region
    $region22: #{tpu_custom_call.1} parent=1 // pred_check
      _
    $region23: #{tpu_custom_call.1} parent=1 // pred_check_branch
      %61 = sbr.rel (0) target = $region25
    $region24: #{tpu_custom_call.1} parent=1 // pred_region
      %62 = dma.done [#allocation6], 128
    $region25: #{tpu_custom_call.1} parent=1 // pred_fallthru
      _
    // Predicated region
    $region26: #{tpu_custom_call.1} parent=1 // pred_check
      _
    $region27: #{tpu_custom_call.1} parent=1 // pred_check_branch
      %64 = sbr.rel (0) target = $region29
    $region28: #{tpu_custom_call.1} parent=1 // pred_region
      %65 = dma.done [#allocation6], 4096
    $region29: #{tpu_custom_call.1} parent=1 // pred_fallthru
      _
    // Predicated region
    $region30: #{tpu_custom_call.1} parent=1 // pred_check
      _
    $region31: #{tpu_custom_call.1} parent=1 // pred_check_branch
      %67 = sbr.rel (0) target = $region33
    $region32: #{tpu_custom_call.1} parent=1 // pred_region
      %68 = dma.done [#allocation9], 2048
    $region33: #{tpu_custom_call.1} parent=1 // pred_fallthru
      _
    %v69 = vld [vmem:[#allocation2] sm:$0xff]
    %v70 = vld [vmem:[#allocation7] sm:$0xff]
    %v71 = vld [vmem:[#allocation7 + $0x8] sm:$0xff]
    %v72 = vld [vmem:[#allocation7 + $0x10] sm:$0xff]
    %v73 = vld [vmem:[#allocation7 + $0x18] sm:$0xff]
    %v74 = vld [vmem:[#allocation7 + $0x20] sm:$0xff]
    %v75 = vld [vmem:[#allocation7 + $0x28] sm:$0xff]
    %v76 = vld [vmem:[#allocation7 + $0x30] sm:$0xff]
    %v77 = vld [vmem:[#allocation7 + $0x38] sm:$0xff]
    %v78 = vld [vmem:[#allocation7 + $0x40] sm:$0xff]
    %v79 = vld [vmem:[#allocation7 + $0x48] sm:$0xff]
    %v80 = vld [vmem:[#allocation7 + $0x50] sm:$0xff]
    %v81 = vld [vmem:[#allocation7 + $0x58] sm:$0xff]
    %v82 = vld [vmem:[#allocation7 + $0x60] sm:$0xff]
    %v83 = vld [vmem:[#allocation7 + $0x68] sm:$0xff]
    %v84 = vld [vmem:[#allocation7 + $0x70] sm:$0xff]
    %v85 = vld [vmem:[#allocation7 + $0x78] sm:$0xff]
    %v86 = vld [vmem:[#allocation7 + $0x80] sm:$0xff]
    %v87 = vld [vmem:[#allocation7 + $0x88] sm:$0xff]
    %v88 = vld [vmem:[#allocation7 + $0x90] sm:$0xff]
    %v89 = vld [vmem:[#allocation7 + $0x98] sm:$0xff]
    %v90 = vld [vmem:[#allocation7 + $0xa0] sm:$0xff]
    %v91 = vld [vmem:[#allocation7 + $0xa8] sm:$0xff]
    %v92 = vld [vmem:[#allocation7 + $0xb0] sm:$0xff]
    %v93 = vld [vmem:[#allocation7 + $0xb8] sm:$0xff]
    %v94 = vld [vmem:[#allocation7 + $0xc0] sm:$0xff]
    %v95 = vld [vmem:[#allocation7 + $0xc8] sm:$0xff]
    %v96 = vld [vmem:[#allocation7 + $0xd0] sm:$0xff]
    %v97 = vld [vmem:[#allocation7 + $0xd8] sm:$0xff]
    %v98 = vld [vmem:[#allocation7 + $0xe0] sm:$0xff]
    %v99 = vld [vmem:[#allocation7 + $0xe8] sm:$0xff]
    %v100 = vld [vmem:[#allocation7 + $0xf0] sm:$0xff]
    %v101 = vld [vmem:[#allocation7 + $0xf8] sm:$0xff]
    %vm102 = vcmask 261120
    %v104 = vsel %vm102, %v69, 0
    %106 = vmatprep.subr.mxu0 0.0
    %107 = vmatpush1.msra.mxu0 0.0
    %108 = vmatprep.subr.mxu0 0.0
    %109 = vmatpush1.msra.mxu0 0.0
    %110 = vmatprep.subr.mxu0 0.0
    %111 = vmatpush1.msra.mxu0 0.0
    %112 = vmatprep.subr.mxu0 0.0
    %113 = vmatpush1.msra.mxu0 0.0
    %114 = vmatprep.subr.mxu0 0.0
    %115 = vmatpush1.msra.mxu0 0.0
    %116 = vmatprep.subr.mxu0 0.0
    %117 = vmatpush1.msra.mxu0 0.0
    %118 = vmatprep.subr.mxu0 0.0
    %119 = vmatpush1.msra.mxu0 0.0
    %120 = vmatprep.subr.mxu0 0.0
    %121 = vmatpush1.msra.mxu0 0.0
    %122 = vmatprep.subr.mxu0 0.0
    %123 = vmatpush1.msra.mxu0 0.0
    %124 = vmatprep.subr.mxu0 0.0
    %125 = vmatpush1.msra.mxu0 0.0
    %126 = vmatprep.subr.mxu0 0.0
    %127 = vmatpush1.msra.mxu0 0.0
    %128 = vmatprep.subr.mxu0 0.0
    %129 = vmatpush1.msra.mxu0 0.0
    %130 = vmatprep.subr.mxu0 %v95
    %131 = vmatpush1.msra.mxu0 %v94
    %132 = vmatprep.subr.mxu0 %v87
    %133 = vmatpush1.msra.mxu0 %v86
    %134 = vmatprep.subr.mxu0 %v79
    %135 = vmatpush1.msra.mxu0 %v78
    %136 = vmatprep.subr.mxu0 %v71
    %137 = vmatpush1.msra.mxu0 %v70
    %138 = vmatprep.subr.mxu0 0.0
    %139 = vmatpush2.msra.mxu0 0.0
    %140 = vmatprep.subr.mxu0 0.0
    %141 = vmatpush2.msra.mxu0 0.0
    %142 = vmatprep.subr.mxu0 0.0
    %143 = vmatpush2.msra.mxu0 0.0
    %144 = vmatprep.subr.mxu0 0.0
    %145 = vmatpush2.msra.mxu0 0.0
    %146 = vmatprep.subr.mxu0 0.0
    %147 = vmatpush2.msra.mxu0 0.0
    %148 = vmatprep.subr.mxu0 0.0
    %149 = vmatpush2.msra.mxu0 0.0
    %150 = vmatprep.subr.mxu0 0.0
    %151 = vmatpush2.msra.mxu0 0.0
    %152 = vmatprep.subr.mxu0 0.0
    %153 = vmatpush2.msra.mxu0 0.0
    %154 = vmatprep.subr.mxu0 0.0
    %155 = vmatpush2.msra.mxu0 0.0
    %156 = vmatprep.subr.mxu0 0.0
    %157 = vmatpush2.msra.mxu0 0.0
    %158 = vmatprep.subr.mxu0 0.0
    %159 = vmatpush2.msra.mxu0 0.0
    %160 = vmatprep.subr.mxu0 0.0
    %161 = vmatpush2.msra.mxu0 0.0
    %162 = vmatprep.subr.mxu0 0.0
    %163 = vmatpush2.msra.mxu0 0.0
    %164 = vmatprep.subr.mxu0 0.0
    %165 = vmatpush2.msra.mxu0 0.0
    %166 = vmatprep.subr.mxu0 0.0
    %167 = vmatpush2.msra.mxu0 0.0
    %168 = vmatprep.subr.mxu0 0.0
    %169 = vmatpush2.msra.mxu0 0.0
    %170 = vmatprep.mubr.f32.mxu0 0.0
    %171 = vmatmul.mubr.f32.gmra.mxu0 %v104
    %v172 = vpop.f32.mrf.mxu0
    %v173 = vadd.f32 0.0, %v172
    %v174 = vpop.f32.mrf.mxu0
    %v175 = vadd.f32 0.0, %v174
    %176 = vdwg.mxu0
    %177 = vmatprep.subr.mxu0 0.0
    %178 = vmatpush1.msra.mxu0 0.0
    %179 = vmatprep.subr.mxu0 0.0
    %180 = vmatpush1.msra.mxu0 0.0
    %181 = vmatprep.subr.mxu0 0.0
    %182 = vmatpush1.msra.mxu0 0.0
    %183 = vmatprep.subr.mxu0 0.0
    %184 = vmatpush1.msra.mxu0 0.0
    %185 = vmatprep.subr.mxu0 0.0
    %186 = vmatpush1.msra.mxu0 0.0
    %187 = vmatprep.subr.mxu0 0.0
    %188 = vmatpush1.msra.mxu0 0.0
    %189 = vmatprep.subr.mxu0 0.0
    %190 = vmatpush1.msra.mxu0 0.0
    %191 = vmatprep.subr.mxu0 0.0
    %192 = vmatpush1.msra.mxu0 0.0
    %193 = vmatprep.subr.mxu0 0.0
    %194 = vmatpush1.msra.mxu0 0.0
    %195 = vmatprep.subr.mxu0 0.0
    %196 = vmatpush1.msra.mxu0 0.0
    %197 = vmatprep.subr.mxu0 0.0
    %198 = vmatpush1.msra.mxu0 0.0
    %199 = vmatprep.subr.mxu0 0.0
    %200 = vmatpush1.msra.mxu0 0.0
    %201 = vmatprep.subr.mxu0 %v97
    %202 = vmatpush1.msra.mxu0 %v96
    %203 = vmatprep.subr.mxu0 %v89
    %204 = vmatpush1.msra.mxu0 %v88
    %205 = vmatprep.subr.mxu0 %v81
    %206 = vmatpush1.msra.mxu0 %v80
    %207 = vmatprep.subr.mxu0 %v73
    %208 = vmatpush1.msra.mxu0 %v72
    %209 = vmatprep.subr.mxu0 0.0
    %210 = vmatpush2.msra.mxu0 0.0
    %211 = vmatprep.subr.mxu0 0.0
    %212 = vmatpush2.msra.mxu0 0.0
    %213 = vmatprep.subr.mxu0 0.0
    %214 = vmatpush2.msra.mxu0 0.0
    %215 = vmatprep.subr.mxu0 0.0
    %216 = vmatpush2.msra.mxu0 0.0
    %217 = vmatprep.subr.mxu0 0.0
    %218 = vmatpush2.msra.mxu0 0.0
    %219 = vmatprep.subr.mxu0 0.0
    %220 = vmatpush2.msra.mxu0 0.0
    %221 = vmatprep.subr.mxu0 0.0
    %222 = vmatpush2.msra.mxu0 0.0
    %223 = vmatprep.subr.mxu0 0.0
    %224 = vmatpush2.msra.mxu0 0.0
    %225 = vmatprep.subr.mxu0 0.0
    %226 = vmatpush2.msra.mxu0 0.0
    %227 = vmatprep.subr.mxu0 0.0
    %228 = vmatpush2.msra.mxu0 0.0
    %229 = vmatprep.subr.mxu0 0.0
    %230 = vmatpush2.msra.mxu0 0.0
    %231 = vmatprep.subr.mxu0 0.0
    %232 = vmatpush2.msra.mxu0 0.0
    %233 = vmatprep.subr.mxu0 0.0
    %234 = vmatpush2.msra.mxu0 0.0
    %235 = vmatprep.subr.mxu0 0.0
    %236 = vmatpush2.msra.mxu0 0.0
    %237 = vmatprep.subr.mxu0 0.0
    %238 = vmatpush2.msra.mxu0 0.0
    %239 = vmatprep.subr.mxu0 0.0
    %240 = vmatpush2.msra.mxu0 0.0
    %241 = vmatprep.mubr.f32.mxu0 0.0
    %242 = vmatmul.mubr.f32.gmra.mxu0 %v104
    %v243 = vpop.f32.mrf.mxu0
    %v244 = vadd.f32 0.0, %v243
    %v245 = vpop.f32.mrf.mxu0
    %v246 = vadd.f32 0.0, %v245
    %247 = vdwg.mxu0
    %248 = vmatprep.subr.mxu0 0.0
    %249 = vmatpush1.msra.mxu0 0.0
    %250 = vmatprep.subr.mxu0 0.0
    %251 = vmatpush1.msra.mxu0 0.0
    %252 = vmatprep.subr.mxu0 0.0
    %253 = vmatpush1.msra.mxu0 0.0
    %254 = vmatprep.subr.mxu0 0.0
    %255 = vmatpush1.msra.mxu0 0.0
    %256 = vmatprep.subr.mxu0 0.0
    %257 = vmatpush1.msra.mxu0 0.0
    %258 = vmatprep.subr.mxu0 0.0
    %259 = vmatpush1.msra.mxu0 0.0
    %260 = vmatprep.subr.mxu0 0.0
    %261 = vmatpush1.msra.mxu0 0.0
    %262 = vmatprep.subr.mxu0 0.0
    %263 = vmatpush1.msra.mxu0 0.0
    %264 = vmatprep.subr.mxu0 0.0
    %265 = vmatpush1.msra.mxu0 0.0
    %266 = vmatprep.subr.mxu0 0.0
    %267 = vmatpush1.msra.mxu0 0.0
    %268 = vmatprep.subr.mxu0 0.0
    %269 = vmatpush1.msra.mxu0 0.0
    %270 = vmatprep.subr.mxu0 0.0
    %271 = vmatpush1.msra.mxu0 0.0
    %272 = vmatprep.subr.mxu0 %v99
    %273 = vmatpush1.msra.mxu0 %v98
    %274 = vmatprep.subr.mxu0 %v91
    %275 = vmatpush1.msra.mxu0 %v90
    %276 = vmatprep.subr.mxu0 %v83
    %277 = vmatpush1.msra.mxu0 %v82
    %278 = vmatprep.subr.mxu0 %v75
    %279 = vmatpush1.msra.mxu0 %v74
    %280 = vmatprep.subr.mxu0 0.0
    %281 = vmatpush2.msra.mxu0 0.0
    %282 = vmatprep.subr.mxu0 0.0
    %283 = vmatpush2.msra.mxu0 0.0
    %284 = vmatprep.subr.mxu0 0.0
    %285 = vmatpush2.msra.mxu0 0.0
    %286 = vmatprep.subr.mxu0 0.0
    %287 = vmatpush2.msra.mxu0 0.0
    %288 = vmatprep.subr.mxu0 0.0
    %289 = vmatpush2.msra.mxu0 0.0
    %290 = vmatprep.subr.mxu0 0.0
    %291 = vmatpush2.msra.mxu0 0.0
    %292 = vmatprep.subr.mxu0 0.0
    %293 = vmatpush2.msra.mxu0 0.0
    %294 = vmatprep.subr.mxu0 0.0
    %295 = vmatpush2.msra.mxu0 0.0
    %296 = vmatprep.subr.mxu0 0.0
    %297 = vmatpush2.msra.mxu0 0.0
    %298 = vmatprep.subr.mxu0 0.0
    %299 = vmatpush2.msra.mxu0 0.0
    %300 = vmatprep.subr.mxu0 0.0
    %301 = vmatpush2.msra.mxu0 0.0
    %302 = vmatprep.subr.mxu0 0.0
    %303 = vmatpush2.msra.mxu0 0.0
    %304 = vmatprep.subr.mxu0 0.0
    %305 = vmatpush2.msra.mxu0 0.0
    %306 = vmatprep.subr.mxu0 0.0
    %307 = vmatpush2.msra.mxu0 0.0
    %308 = vmatprep.subr.mxu0 0.0
    %309 = vmatpush2.msra.mxu0 0.0
    %310 = vmatprep.subr.mxu0 0.0
    %311 = vmatpush2.msra.mxu0 0.0
    %312 = vmatprep.mubr.f32.mxu0 0.0
    %313 = vmatmul.mubr.f32.gmra.mxu0 %v104
    %v314 = vpop.f32.mrf.mxu0
    %v315 = vadd.f32 0.0, %v314
    %v316 = vpop.f32.mrf.mxu0
    %v317 = vadd.f32 0.0, %v316
    %318 = vdwg.mxu0
    %319 = vmatprep.subr.mxu0 0.0
    %320 = vmatpush1.msra.mxu0 0.0
    %321 = vmatprep.subr.mxu0 0.0
    %322 = vmatpush1.msra.mxu0 0.0
    %323 = vmatprep.subr.mxu0 0.0
    %324 = vmatpush1.msra.mxu0 0.0
    %325 = vmatprep.subr.mxu0 0.0
    %326 = vmatpush1.msra.mxu0 0.0
    %327 = vmatprep.subr.mxu0 0.0
    %328 = vmatpush1.msra.mxu0 0.0
    %329 = vmatprep.subr.mxu0 0.0
    %330 = vmatpush1.msra.mxu0 0.0
    %331 = vmatprep.subr.mxu0 0.0
    %332 = vmatpush1.msra.mxu0 0.0
    %333 = vmatprep.subr.mxu0 0.0
    %334 = vmatpush1.msra.mxu0 0.0
    %335 = vmatprep.subr.mxu0 0.0
    %336 = vmatpush1.msra.mxu0 0.0
    %337 = vmatprep.subr.mxu0 0.0
    %338 = vmatpush1.msra.mxu0 0.0
    %339 = vmatprep.subr.mxu0 0.0
    %340 = vmatpush1.msra.mxu0 0.0
    %341 = vmatprep.subr.mxu0 0.0
    %342 = vmatpush1.msra.mxu0 0.0
    %343 = vmatprep.subr.mxu0 %v101
    %344 = vmatpush1.msra.mxu0 %v100
    %345 = vmatprep.subr.mxu0 %v93
    %346 = vmatpush1.msra.mxu0 %v92
    %347 = vmatprep.subr.mxu0 %v85
    %348 = vmatpush1.msra.mxu0 %v84
    %349 = vmatprep.subr.mxu0 %v77
    %350 = vmatpush1.msra.mxu0 %v76
    %351 = vmatprep.subr.mxu0 0.0
    %352 = vmatpush2.msra.mxu0 0.0
    %353 = vmatprep.subr.mxu0 0.0
    %354 = vmatpush2.msra.mxu0 0.0
    %355 = vmatprep.subr.mxu0 0.0
    %356 = vmatpush2.msra.mxu0 0.0
    %357 = vmatprep.subr.mxu0 0.0
    %358 = vmatpush2.msra.mxu0 0.0
    %359 = vmatprep.subr.mxu0 0.0
    %360 = vmatpush2.msra.mxu0 0.0
    %361 = vmatprep.subr.mxu0 0.0
    %362 = vmatpush2.msra.mxu0 0.0
    %363 = vmatprep.subr.mxu0 0.0
    %364 = vmatpush2.msra.mxu0 0.0
    %365 = vmatprep.subr.mxu0 0.0
    %366 = vmatpush2.msra.mxu0 0.0
    %367 = vmatprep.subr.mxu0 0.0
    %368 = vmatpush2.msra.mxu0 0.0
    %369 = vmatprep.subr.mxu0 0.0
    %370 = vmatpush2.msra.mxu0 0.0
    %371 = vmatprep.subr.mxu0 0.0
    %372 = vmatpush2.msra.mxu0 0.0
    %373 = vmatprep.subr.mxu0 0.0
    %374 = vmatpush2.msra.mxu0 0.0
    %375 = vmatprep.subr.mxu0 0.0
    %376 = vmatpush2.msra.mxu0 0.0
    %377 = vmatprep.subr.mxu0 0.0
    %378 = vmatpush2.msra.mxu0 0.0
    %379 = vmatprep.subr.mxu0 0.0
    %380 = vmatpush2.msra.mxu0 0.0
    %381 = vmatprep.subr.mxu0 0.0
    %382 = vmatpush2.msra.mxu0 0.0
    %383 = vmatprep.mubr.f32.mxu0 0.0
    %384 = vmatmul.mubr.f32.gmra.mxu0 %v104
    %v385 = vpop.f32.mrf.mxu0
    %v386 = vadd.f32 0.0, %v385
    %v387 = vpop.f32.mrf.mxu0
    %v388 = vadd.f32 0.0, %v387
    %389 = vdwg.mxu0
    %v390 = vld [vmem:[#allocation5] sm:$0xff]
    %v391 = vld [vmem:[#allocation8] sm:$0xff]
    %v392 = vld [vmem:[#allocation8 + $0x8] sm:$0xff]
    %v393 = vld [vmem:[#allocation8 + $0x10] sm:$0xff]
    %v394 = vld [vmem:[#allocation8 + $0x18] sm:$0xff]
    %v395 = vld [vmem:[#allocation8 + $0x20] sm:$0xff]
    %v396 = vld [vmem:[#allocation8 + $0x28] sm:$0xff]
    %v397 = vld [vmem:[#allocation8 + $0x30] sm:$0xff]
    %v398 = vld [vmem:[#allocation8 + $0x38] sm:$0xff]
    %v399 = vld [vmem:[#allocation8 + $0x40] sm:$0xff]
    %v400 = vld [vmem:[#allocation8 + $0x48] sm:$0xff]
    %v401 = vld [vmem:[#allocation8 + $0x50] sm:$0xff]
    %v402 = vld [vmem:[#allocation8 + $0x58] sm:$0xff]
    %v403 = vld [vmem:[#allocation8 + $0x60] sm:$0xff]
    %v404 = vld [vmem:[#allocation8 + $0x68] sm:$0xff]
    %v405 = vld [vmem:[#allocation8 + $0x70] sm:$0xff]
    %v406 = vld [vmem:[#allocation8 + $0x78] sm:$0xff]
    %vm407 = vcmask 130048
    %v409 = vsel %vm407, %v390, 0
    %411 = vmatprep.subr.mxu0 0.0
    %412 = vmatpush1.msra.mxu0 0.0
    %413 = vmatprep.subr.mxu0 0.0
    %414 = vmatpush1.msra.mxu0 0.0
    %415 = vmatprep.subr.mxu0 0.0
    %416 = vmatpush1.msra.mxu0 0.0
    %417 = vmatprep.subr.mxu0 0.0
    %418 = vmatpush1.msra.mxu0 0.0
    %419 = vmatprep.subr.mxu0 0.0
    %420 = vmatpush1.msra.mxu0 0.0
    %421 = vmatprep.subr.mxu0 0.0
    %422 = vmatpush1.msra.mxu0 0.0
    %423 = vmatprep.subr.mxu0 0.0
    %424 = vmatpush1.msra.mxu0 0.0
    %425 = vmatprep.subr.mxu0 0.0
    %426 = vmatpush1.msra.mxu0 0.0
    %427 = vmatprep.subr.mxu0 0.0
    %428 = vmatpush1.msra.mxu0 0.0
    %429 = vmatprep.subr.mxu0 0.0
    %430 = vmatpush1.msra.mxu0 0.0
    %431 = vmatprep.subr.mxu0 0.0
    %432 = vmatpush1.msra.mxu0 0.0
    %433 = vmatprep.subr.mxu0 0.0
    %434 = vmatpush1.msra.mxu0 0.0
    %435 = vmatprep.subr.mxu0 0.0
    %436 = vmatpush1.msra.mxu0 0.0
    %437 = vmatprep.subr.mxu0 0.0
    %438 = vmatpush1.msra.mxu0 0.0
    %439 = vmatprep.subr.mxu0 %v400
    %440 = vmatpush1.msra.mxu0 %v399
    %441 = vmatprep.subr.mxu0 %v392
    %442 = vmatpush1.msra.mxu0 %v391
    %443 = vmatprep.subr.mxu0 0.0
    %444 = vmatpush2.msra.mxu0 0.0
    %445 = vmatprep.subr.mxu0 0.0
    %446 = vmatpush2.msra.mxu0 0.0
    %447 = vmatprep.subr.mxu0 0.0
    %448 = vmatpush2.msra.mxu0 0.0
    %449 = vmatprep.subr.mxu0 0.0
    %450 = vmatpush2.msra.mxu0 0.0
    %451 = vmatprep.subr.mxu0 0.0
    %452 = vmatpush2.msra.mxu0 0.0
    %453 = vmatprep.subr.mxu0 0.0
    %454 = vmatpush2.msra.mxu0 0.0
    %455 = vmatprep.subr.mxu0 0.0
    %456 = vmatpush2.msra.mxu0 0.0
    %457 = vmatprep.subr.mxu0 0.0
    %458 = vmatpush2.msra.mxu0 0.0
    %459 = vmatprep.subr.mxu0 0.0
    %460 = vmatpush2.msra.mxu0 0.0
    %461 = vmatprep.subr.mxu0 0.0
    %462 = vmatpush2.msra.mxu0 0.0
    %463 = vmatprep.subr.mxu0 0.0
    %464 = vmatpush2.msra.mxu0 0.0
    %465 = vmatprep.subr.mxu0 0.0
    %466 = vmatpush2.msra.mxu0 0.0
    %467 = vmatprep.subr.mxu0 0.0
    %468 = vmatpush2.msra.mxu0 0.0
    %469 = vmatprep.subr.mxu0 0.0
    %470 = vmatpush2.msra.mxu0 0.0
    %471 = vmatprep.subr.mxu0 0.0
    %472 = vmatpush2.msra.mxu0 0.0
    %473 = vmatprep.subr.mxu0 0.0
    %474 = vmatpush2.msra.mxu0 0.0
    %475 = vmatprep.mubr.f32.mxu0 0.0
    %476 = vmatmul.mubr.f32.gmra.mxu0 %v409
    %v477 = vpop.f32.mrf.mxu0
    %v478 = vadd.f32 0.0, %v477
    %v479 = vpop.f32.mrf.mxu0
    %v480 = vadd.f32 0.0, %v479
    %481 = vdwg.mxu0
    %482 = vmatprep.subr.mxu0 0.0
    %483 = vmatpush1.msra.mxu0 0.0
    %484 = vmatprep.subr.mxu0 0.0
    %485 = vmatpush1.msra.mxu0 0.0
    %486 = vmatprep.subr.mxu0 0.0
    %487 = vmatpush1.msra.mxu0 0.0
    %488 = vmatprep.subr.mxu0 0.0
    %489 = vmatpush1.msra.mxu0 0.0
    %490 = vmatprep.subr.mxu0 0.0
    %491 = vmatpush1.msra.mxu0 0.0
    %492 = vmatprep.subr.mxu0 0.0
    %493 = vmatpush1.msra.mxu0 0.0
    %494 = vmatprep.subr.mxu0 0.0
    %495 = vmatpush1.msra.mxu0 0.0
    %496 = vmatprep.subr.mxu0 0.0
    %497 = vmatpush1.msra.mxu0 0.0
    %498 = vmatprep.subr.mxu0 0.0
    %499 = vmatpush1.msra.mxu0 0.0
    %500 = vmatprep.subr.mxu0 0.0
    %501 = vmatpush1.msra.mxu0 0.0
    %502 = vmatprep.subr.mxu0 0.0
    %503 = vmatpush1.msra.mxu0 0.0
    %504 = vmatprep.subr.mxu0 0.0
    %505 = vmatpush1.msra.mxu0 0.0
    %506 = vmatprep.subr.mxu0 0.0
    %507 = vmatpush1.msra.mxu0 0.0
    %508 = vmatprep.subr.mxu0 0.0
    %509 = vmatpush1.msra.mxu0 0.0
    %510 = vmatprep.subr.mxu0 %v402
    %511 = vmatpush1.msra.mxu0 %v401
    %512 = vmatprep.subr.mxu0 %v394
    %513 = vmatpush1.msra.mxu0 %v393
    %514 = vmatprep.subr.mxu0 0.0
    %515 = vmatpush2.msra.mxu0 0.0
    %516 = vmatprep.subr.mxu0 0.0
    %517 = vmatpush2.msra.mxu0 0.0
    %518 = vmatprep.subr.mxu0 0.0
    %519 = vmatpush2.msra.mxu0 0.0
    %520 = vmatprep.subr.mxu0 0.0
    %521 = vmatpush2.msra.mxu0 0.0
    %522 = vmatprep.subr.mxu0 0.0
    %523 = vmatpush2.msra.mxu0 0.0
    %524 = vmatprep.subr.mxu0 0.0
    %525 = vmatpush2.msra.mxu0 0.0
    %526 = vmatprep.subr.mxu0 0.0
    %527 = vmatpush2.msra.mxu0 0.0
    %528 = vmatprep.subr.mxu0 0.0
    %529 = vmatpush2.msra.mxu0 0.0
    %530 = vmatprep.subr.mxu0 0.0
    %531 = vmatpush2.msra.mxu0 0.0
    %532 = vmatprep.subr.mxu0 0.0
    %533 = vmatpush2.msra.mxu0 0.0
    %534 = vmatprep.subr.mxu0 0.0
    %535 = vmatpush2.msra.mxu0 0.0
    %536 = vmatprep.subr.mxu0 0.0
    %537 = vmatpush2.msra.mxu0 0.0
    %538 = vmatprep.subr.mxu0 0.0
    %539 = vmatpush2.msra.mxu0 0.0
    %540 = vmatprep.subr.mxu0 0.0
    %541 = vmatpush2.msra.mxu0 0.0
    %542 = vmatprep.subr.mxu0 0.0
    %543 = vmatpush2.msra.mxu0 0.0
    %544 = vmatprep.subr.mxu0 0.0
    %545 = vmatpush2.msra.mxu0 0.0
    %546 = vmatprep.mubr.f32.mxu0 0.0
    %547 = vmatmul.mubr.f32.gmra.mxu0 %v409
    %v548 = vpop.f32.mrf.mxu0
    %v549 = vadd.f32 0.0, %v548
    %v550 = vpop.f32.mrf.mxu0
    %v551 = vadd.f32 0.0, %v550
    %552 = vdwg.mxu0
    %553 = vmatprep.subr.mxu0 0.0
    %554 = vmatpush1.msra.mxu0 0.0
    %555 = vmatprep.subr.mxu0 0.0
    %556 = vmatpush1.msra.mxu0 0.0
    %557 = vmatprep.subr.mxu0 0.0
    %558 = vmatpush1.msra.mxu0 0.0
    %559 = vmatprep.subr.mxu0 0.0
    %560 = vmatpush1.msra.mxu0 0.0
    %561 = vmatprep.subr.mxu0 0.0
    %562 = vmatpush1.msra.mxu0 0.0
    %563 = vmatprep.subr.mxu0 0.0
    %564 = vmatpush1.msra.mxu0 0.0
    %565 = vmatprep.subr.mxu0 0.0
    %566 = vmatpush1.msra.mxu0 0.0
    %567 = vmatprep.subr.mxu0 0.0
    %568 = vmatpush1.msra.mxu0 0.0
    %569 = vmatprep.subr.mxu0 0.0
    %570 = vmatpush1.msra.mxu0 0.0
    %571 = vmatprep.subr.mxu0 0.0
    %572 = vmatpush1.msra.mxu0 0.0
    %573 = vmatprep.subr.mxu0 0.0
    %574 = vmatpush1.msra.mxu0 0.0
    %575 = vmatprep.subr.mxu0 0.0
    %576 = vmatpush1.msra.mxu0 0.0
    %577 = vmatprep.subr.mxu0 0.0
    %578 = vmatpush1.msra.mxu0 0.0
    %579 = vmatprep.subr.mxu0 0.0
    %580 = vmatpush1.msra.mxu0 0.0
    %581 = vmatprep.subr.mxu0 %v404
    %582 = vmatpush1.msra.mxu0 %v403
    %583 = vmatprep.subr.mxu0 %v396
    %584 = vmatpush1.msra.mxu0 %v395
    %585 = vmatprep.subr.mxu0 0.0
    %586 = vmatpush2.msra.mxu0 0.0
    %587 = vmatprep.subr.mxu0 0.0
    %588 = vmatpush2.msra.mxu0 0.0
    %589 = vmatprep.subr.mxu0 0.0
    %590 = vmatpush2.msra.mxu0 0.0
    %591 = vmatprep.subr.mxu0 0.0
    %592 = vmatpush2.msra.mxu0 0.0
    %593 = vmatprep.subr.mxu0 0.0
    %594 = vmatpush2.msra.mxu0 0.0
    %595 = vmatprep.subr.mxu0 0.0
    %596 = vmatpush2.msra.mxu0 0.0
    %597 = vmatprep.subr.mxu0 0.0
    %598 = vmatpush2.msra.mxu0 0.0
    %599 = vmatprep.subr.mxu0 0.0
    %600 = vmatpush2.msra.mxu0 0.0
    %601 = vmatprep.subr.mxu0 0.0
    %602 = vmatpush2.msra.mxu0 0.0
    %603 = vmatprep.subr.mxu0 0.0
    %604 = vmatpush2.msra.mxu0 0.0
    %605 = vmatprep.subr.mxu0 0.0
    %606 = vmatpush2.msra.mxu0 0.0
    %607 = vmatprep.subr.mxu0 0.0
    %608 = vmatpush2.msra.mxu0 0.0
    %609 = vmatprep.subr.mxu0 0.0
    %610 = vmatpush2.msra.mxu0 0.0
    %611 = vmatprep.subr.mxu0 0.0
    %612 = vmatpush2.msra.mxu0 0.0
    %613 = vmatprep.subr.mxu0 0.0
    %614 = vmatpush2.msra.mxu0 0.0
    %615 = vmatprep.subr.mxu0 0.0
    %616 = vmatpush2.msra.mxu0 0.0
    %617 = vmatprep.mubr.f32.mxu0 0.0
    %618 = vmatmul.mubr.f32.gmra.mxu0 %v409
    %v619 = vpop.f32.mrf.mxu0
    %v620 = vadd.f32 0.0, %v619
    %v621 = vpop.f32.mrf.mxu0
    %v622 = vadd.f32 0.0, %v621
    %623 = vdwg.mxu0
    %624 = vmatprep.subr.mxu0 0.0
    %625 = vmatpush1.msra.mxu0 0.0
    %626 = vmatprep.subr.mxu0 0.0
    %627 = vmatpush1.msra.mxu0 0.0
    %628 = vmatprep.subr.mxu0 0.0
    %629 = vmatpush1.msra.mxu0 0.0
    %630 = vmatprep.subr.mxu0 0.0
    %631 = vmatpush1.msra.mxu0 0.0
    %632 = vmatprep.subr.mxu0 0.0
    %633 = vmatpush1.msra.mxu0 0.0
    %634 = vmatprep.subr.mxu0 0.0
    %635 = vmatpush1.msra.mxu0 0.0
    %636 = vmatprep.subr.mxu0 0.0
    %637 = vmatpush1.msra.mxu0 0.0
    %638 = vmatprep.subr.mxu0 0.0
    %639 = vmatpush1.msra.mxu0 0.0
    %640 = vmatprep.subr.mxu0 0.0
    %641 = vmatpush1.msra.mxu0 0.0
    %642 = vmatprep.subr.mxu0 0.0
    %643 = vmatpush1.msra.mxu0 0.0
    %644 = vmatprep.subr.mxu0 0.0
    %645 = vmatpush1.msra.mxu0 0.0
    %646 = vmatprep.subr.mxu0 0.0
    %647 = vmatpush1.msra.mxu0 0.0
    %648 = vmatprep.subr.mxu0 0.0
    %649 = vmatpush1.msra.mxu0 0.0
    %650 = vmatprep.subr.mxu0 0.0
    %651 = vmatpush1.msra.mxu0 0.0
    %652 = vmatprep.subr.mxu0 %v406
    %653 = vmatpush1.msra.mxu0 %v405
    %654 = vmatprep.subr.mxu0 %v398
    %655 = vmatpush1.msra.mxu0 %v397
    %656 = vmatprep.subr.mxu0 0.0
    %657 = vmatpush2.msra.mxu0 0.0
    %658 = vmatprep.subr.mxu0 0.0
    %659 = vmatpush2.msra.mxu0 0.0
    %660 = vmatprep.subr.mxu0 0.0
    %661 = vmatpush2.msra.mxu0 0.0
    %662 = vmatprep.subr.mxu0 0.0
    %663 = vmatpush2.msra.mxu0 0.0
    %664 = vmatprep.subr.mxu0 0.0
    %665 = vmatpush2.msra.mxu0 0.0
    %666 = vmatprep.subr.mxu0 0.0
    %667 = vmatpush2.msra.mxu0 0.0
    %668 = vmatprep.subr.mxu0 0.0
    %669 = vmatpush2.msra.mxu0 0.0
    %670 = vmatprep.subr.mxu0 0.0
    %671 = vmatpush2.msra.mxu0 0.0
    %672 = vmatprep.subr.mxu0 0.0
    %673 = vmatpush2.msra.mxu0 0.0
    %674 = vmatprep.subr.mxu0 0.0
    %675 = vmatpush2.msra.mxu0 0.0
    %676 = vmatprep.subr.mxu0 0.0
    %677 = vmatpush2.msra.mxu0 0.0
    %678 = vmatprep.subr.mxu0 0.0
    %679 = vmatpush2.msra.mxu0 0.0
    %680 = vmatprep.subr.mxu0 0.0
    %681 = vmatpush2.msra.mxu0 0.0
    %682 = vmatprep.subr.mxu0 0.0
    %683 = vmatpush2.msra.mxu0 0.0
    %684 = vmatprep.subr.mxu0 0.0
    %685 = vmatpush2.msra.mxu0 0.0
    %686 = vmatprep.subr.mxu0 0.0
    %687 = vmatpush2.msra.mxu0 0.0
    %688 = vmatprep.mubr.f32.mxu0 0.0
    %689 = vmatmul.mubr.f32.gmra.mxu0 %v409
    %v690 = vpop.f32.mrf.mxu0
    %v691 = vadd.f32 0.0, %v690
    %v692 = vpop.f32.mrf.mxu0
    %v693 = vadd.f32 0.0, %v692
    %694 = vdwg.mxu0
    %v695 = vmul.f32 %v173, %v478
    %v696 = vmul.f32 %v175, %v480
    %v697 = vmul.f32 %v244, %v549
    %v698 = vmul.f32 %v246, %v551
    %v699 = vmul.f32 %v315, %v620
    %v700 = vmul.f32 %v317, %v622
    %v701 = vmul.f32 %v386, %v691
    %v702 = vmul.f32 %v388, %v693
    %703 = vst [vmem:[#allocation10] sm:$0xff] %v695
    %704 = vst [vmem:[#allocation10 + $0x8] sm:$0xff] %v696
    %705 = vst [vmem:[#allocation10 + $0x10] sm:$0xff] %v697
    %706 = vst [vmem:[#allocation10 + $0x18] sm:$0xff] %v698
    %707 = vst [vmem:[#allocation10 + $0x20] sm:$0xff] %v699
    %708 = vst [vmem:[#allocation10 + $0x28] sm:$0xff] %v700
    %709 = vst [vmem:[#allocation10 + $0x30] sm:$0xff] %v701
    %710 = vst [vmem:[#allocation10 + $0x38] sm:$0xff] %v702
    // Predicated region
    $region34: #{tpu_custom_call.1} parent=1 // pred_check
      _
    $region35: #{tpu_custom_call.1} parent=1 // pred_check_branch
      %712 = sbr.rel (0) target = $region37
    $region36: #{tpu_custom_call.1} parent=1 // pred_region
      %s714 = ssub.s32 1024, 1024
      %715 = vsyncadd [#allocation4], %s714
      %s717 = sshll.u32 [#allocation10], 4
      %s718 = int_to_ptr.vmem [resolvable:$true] %s717
      %720 = dma.vmem_to_hbm [thread:$0]  %s718, 1024, %s4, [#allocation4]
    $region37: #{tpu_custom_call.1} parent=1 // pred_fallthru
      _
    // Predicated region
    $region38: #{tpu_custom_call.1} parent=1 // pred_check
      _
    $region39: #{tpu_custom_call.1} parent=1 // pred_check_branch
      %722 = sbr.rel (0) target = $region41
    $region40: #{tpu_custom_call.1} parent=1 // pred_region
      %723 = dma.done [#allocation4], 1024
    $region41: #{tpu_custom_call.1} parent=1 // pred_fallthru
      _
    %724 = vsyncpa [#allocation3], 1
    %725 = vsyncpa [#allocation6], 1
    %726 = vsyncpa [#allocation9], 1
    %727 = vsyncpa [#allocation4], 1

</llo_original>
